<compile_context>
chip_gen: v7x
topology: tpu7x:2x2x1
jax: 0.10.0
libtpu: 0.0.40
codegen_flags: <defaults>
</compile_context>

<pallas_src>
import functools

import jax
import jax.numpy as jnp
from jax.experimental import pallas as pl
from jax.experimental.pallas import tpu as pltpu


def _round_up(n, m):
    return ((n + m - 1) // m) * m


def _has_bf16_vpu():
    """v6e/v7x have a bf16 VPU/EUP; v5e and older do not (keep f32 epilogue)."""
    try:
        kind = jax.devices()[0].device_kind.lower()
    except Exception:
        return True
    return not any(tag in kind for tag in ("v2", "v3", "v4", "v5"))


def _actor_kernel(a_pad, x_ref, w1_ref, b1_ref, w2_ref, b2_ref, w3_ref, b3_ref,
                  wh_ref, bh_ref, out_ref):
    cdt = w1_ref.dtype   # MXU operand dtype (bf16 on v6e/v7x, f32 fallback)
    edt = b1_ref.dtype   # elementwise (bias + ReLU) dtype: bf16 where VPU has it

    def layer(h, w_ref, b_ref):
        acc = jnp.dot(h, w_ref[...], preferred_element_type=jnp.float32)
        # cast f32 accumulator once, do add+relu in the epilogue dtype, and the
        # result is already in the matmul dtype for the next layer.
        return jnp.maximum(acc.astype(edt) + b_ref[...], 0).astype(cdt)

    h = layer(x_ref[...].astype(cdt), w1_ref, b1_ref)
    h = layer(h, w2_ref, b2_ref)
    h = layer(h, w3_ref, b3_ref)

    # Fused, lane-aligned mu|sigma head: one (64, 2*a_pad) matmul, f32 epilogue
    # (softplus + 1e-4 stays accurate and positive).
    s = jnp.dot(h, wh_ref[...], preferred_element_type=jnp.float32) + bh_ref[...]
    # numerically stable softplus: max(s, 0) + log1p(exp(-|s|))
    sp = jnp.maximum(s, 0.0) + jnp.log1p(jnp.exp(-jnp.abs(s)))
    col = jax.lax.broadcasted_iota(jnp.int32, s.shape, dimension=1)
    # lanes [0, a_pad): mean (identity); lanes [a_pad, 2*a_pad): variance.
    out_ref[...] = jnp.where(col < a_pad, s, sp + 0.0001)


def actor_forward(x, params, *, block_b=4096, use_bf16=True, bf16_epilogue=None):
    """x: (B, s_dim). params: dict of (in,out) weights and (1,out) biases.

    Returns (mean, variance), each (B, a_dim) float32.
    """
    x = jnp.asarray(x)
    B, s_dim = x.shape
    d1 = params["w1"].shape[1]
    d2 = params["w2"].shape[1]
    d3 = params["w3"].shape[1]
    a_dim = params["bmu"].shape[1]
    a_pad = _round_up(a_dim, 128)          # lane-align each head to a full vreg

    cdt = jnp.bfloat16 if use_bf16 else jnp.float32
    if bf16_epilogue is None:
        bf16_epilogue = use_bf16 and _has_bf16_vpu()
    edt = jnp.bfloat16 if (use_bf16 and bf16_epilogue) else jnp.float32

    w1 = params["w1"].astype(cdt)
    w2 = params["w2"].astype(cdt)
    w3 = params["w3"].astype(cdt)
    # Fused, zero-padded head: mean -> lanes [0, a_pad), variance -> [a_pad, 2*a_pad).
    wh = jnp.zeros((d3, 2 * a_pad), jnp.float32)
    wh = wh.at[:, :a_dim].set(params["wmu"].astype(jnp.float32))
    wh = wh.at[:, a_pad:a_pad + a_dim].set(params["wsig"].astype(jnp.float32))
    wh = wh.astype(cdt)

    b1 = params["b1"].astype(edt)
    b2 = params["b2"].astype(edt)
    b3 = params["b3"].astype(edt)
    bh = jnp.zeros((1, 2 * a_pad), jnp.float32)
    bh = bh.at[:, :a_dim].set(params["bmu"].astype(jnp.float32))
    bh = bh.at[:, a_pad:a_pad + a_dim].set(params["bsig"].astype(jnp.float32))

    # x only feeds the MXU, so ship it in the matmul dtype (halves its HBM stream).
    x = x.astype(cdt)

    # --- batch tiling --------------------------------------------------------
    block_b = max(256, _round_up(block_b, 256))
    if B <= 256:
        tb = _round_up(max(B, 1), 8)
    else:
        tb = min(block_b, _round_up(B, 256))
        # Keep >= 2 grid steps so ("parallel",) can shard batch tiles across
        # both TensorCores on v7x.
        if _round_up(B, tb) // tb < 2:
            tb = max(256, _round_up(pl.cdiv(B, 2), 256))
    B_pad = _round_up(B, tb)
    if B_pad != B:
        x = jnp.pad(x, ((0, B_pad - B), (0, 0)))
    grid = (B_pad // tb,)

    batched = lambda i: (i, 0)
    const = lambda i: (0, 0)   # weights/biases stay VMEM-resident across steps

    weights_and_biases = (w1, b1, w2, b2, w3, b3, wh, bh)
    in_specs = [pl.BlockSpec((tb, s_dim), batched)] + [
        pl.BlockSpec(a.shape, const) for a in weights_and_biases
    ]
    out_spec = pl.BlockSpec((tb, 2 * a_pad), batched)

    flops = 2 * B_pad * (s_dim * d1 + d1 * d2 + d2 * d3 + d3 * 2 * a_pad)
    weight_bytes = sum(int(a.size) * a.dtype.itemsize for a in weights_and_biases)
    x_row_bytes = _round_up(s_dim, 128) * x.dtype.itemsize      # lane-padded layout
    out_row_bytes = 2 * a_pad * 4
    cost = pl.CostEstimate(
        flops=flops,
        transcendentals=2 * B_pad * 2 * a_pad,   # exp + log1p on every head column
        bytes_accessed=B_pad * (x_row_bytes + out_row_bytes) + weight_bytes,
    )

    out = pl.pallas_call(
        functools.partial(_actor_kernel, a_pad),
        out_shape=jax.ShapeDtypeStruct((B_pad, 2 * a_pad), jnp.float32),
        grid=grid,
        in_specs=in_specs,
        out_specs=out_spec,
        compiler_params=pltpu.CompilerParams(
            dimension_semantics=("parallel",),   # shard batch tiles over v7x's 2 TCs
        ),
        cost_estimate=cost,
    )(x, *weights_and_biases)

    mean = out[:B, :a_dim]
    var = out[:B, a_pad:a_pad + a_dim]
    return mean, var


def init_actor_params(key, s_dim, a_dim):
    """Deterministic synthetic init mirroring the PyTorch module:
    weights ~ N(0, 0.01); biases ~ U(-1/sqrt(fan_in), 1/sqrt(fan_in))."""
    dims = [(s_dim, 256), (256, 128), (128, 64), (64, a_dim), (64, a_dim)]
    names = ["1", "2", "3", "mu", "sig"]
    params = {}
    for (fan_in, fan_out), name in zip(dims, names):
        key, kw, kb = jax.random.split(key, 3)
        w = 0.01 * jax.random.normal(kw, (fan_in, fan_out), dtype=jnp.float32)
        bound = 1.0 / jnp.sqrt(jnp.float32(fan_in))
        b = jax.random.uniform(kb, (1, fan_out), dtype=jnp.float32,
                               minval=-bound, maxval=bound)
        params[f"w{name}"] = w
        params[f"b{name}"] = b
    return params


def actor_reference(x, p):
    h = jax.nn.relu(x @ p["w1"] + p["b1"])
    h = jax.nn.relu(h @ p["w2"] + p["b2"])
    h = jax.nn.relu(h @ p["w3"] + p["b3"])
    mean = h @ p["wmu"] + p["bmu"]
    var = jax.nn.softplus(h @ p["wsig"] + p["bsig"]) + 0.0001
    return mean, var


# TODO(synk): select_action / loss_func (Normal rsample, log_prob, entropy) are
# host-side distribution utilities and are intentionally not ported to the kernel.

if __name__ == "__main__":
    key = jax.random.PRNGKey(0)
    s_dim, a_dim = 32, 8

    kx, kp, kx2 = jax.random.split(key, 3)
    params = init_actor_params(kp, s_dim, a_dim)

    # Small batch: single grid step.
    x = jax.random.normal(kx, (8, s_dim), dtype=jnp.float32)
    mean, var = actor_forward(x, params)
    jax.block_until_ready((mean, var))
    mean_ref, var_ref = actor_reference(x, params)
    assert mean.shape == (8, a_dim) and var.shape == (8, a_dim)
    # bf16 matmul operands / epilogue with f32 accumulation -> loosened tolerance.
    assert jnp.allclose(mean, mean_ref, atol=1e-2, rtol=1e-2)
    assert jnp.allclose(var, var_ref, atol=1e-2, rtol=1e-2)
    assert bool(jnp.all(var > 0.0))

    # Non-multiple batch: exercises batch padding and a 2-step ("parallel") grid.
    x2 = jax.random.normal(kx2, (384, s_dim), dtype=jnp.float32)
    mean2, var2 = actor_forward(x2, params)
    jax.block_until_ready((mean2, var2))
    mean2_ref, var2_ref = actor_reference(x2, params)
    assert mean2.shape == (384, a_dim) and var2.shape == (384, a_dim)
    assert jnp.allclose(mean2, mean2_ref, atol=1e-2, rtol=1e-2)
    assert jnp.allclose(var2, var2_ref, atol=1e-2, rtol=1e-2)
    assert bool(jnp.all(var2 > 0.0))

    print("KERNEL_OK")
</pallas_src>

<mosaic_0001>
module attributes {stable_mosaic.version = 11 : i64} {
  func.func @_actor_kernel(%arg0: i32, %arg1: memref<8x32xbf16, #tpu.memory_space<vmem>>, %arg2: memref<32x256xbf16, #tpu.memory_space<vmem>>, %arg3: memref<1x256xbf16, #tpu.memory_space<vmem>>, %arg4: memref<256x128xbf16, #tpu.memory_space<vmem>>, %arg5: memref<1x128xbf16, #tpu.memory_space<vmem>>, %arg6: memref<128x64xbf16, #tpu.memory_space<vmem>>, %arg7: memref<1x64xbf16, #tpu.memory_space<vmem>>, %arg8: memref<64x256xbf16, #tpu.memory_space<vmem>>, %arg9: memref<1x256xf32, #tpu.memory_space<vmem>>, %arg10: memref<8x256xf32, #tpu.memory_space<vmem>>) attributes {dimension_semantics = [#tpu.dimension_semantics<parallel>], iteration_bounds = array<i64: 1>, scalar_prefetch = 0 : i64, scratch_operands = 0 : i64, tpu.core_type = #tpu.core_type<tc>, window_params = [{transform_indices = @transform_0, window_bounds = array<i64: 8, 32>}, {pipeline_mode = #tpu.pipeline_mode<synchronous>, transform_indices = @transform_1, window_bounds = array<i64: 32, 256>}, {pipeline_mode = #tpu.pipeline_mode<synchronous>, transform_indices = @transform_2, window_bounds = array<i64: 1, 256>}, {pipeline_mode = #tpu.pipeline_mode<synchronous>, transform_indices = @transform_3, window_bounds = array<i64: 256, 128>}, {pipeline_mode = #tpu.pipeline_mode<synchronous>, transform_indices = @transform_4, window_bounds = array<i64: 1, 128>}, {pipeline_mode = #tpu.pipeline_mode<synchronous>, transform_indices = @transform_5, window_bounds = array<i64: 128, 64>}, {pipeline_mode = #tpu.pipeline_mode<synchronous>, transform_indices = @transform_6, window_bounds = array<i64: 1, 64>}, {pipeline_mode = #tpu.pipeline_mode<synchronous>, transform_indices = @transform_7, window_bounds = array<i64: 64, 256>}, {pipeline_mode = #tpu.pipeline_mode<synchronous>, transform_indices = @transform_8, window_bounds = array<i64: 1, 256>}, {transform_indices = @transform_9, window_bounds = array<i64: 8, 256>}]} {
    %c0 = arith.constant 0 : index
    %c0_0 = arith.constant 0 : index
    %0 = vector.load %arg1[%c0, %c0_0] : memref<8x32xbf16, #tpu.memory_space<vmem>>, vector<8x32xbf16>
    %c0_1 = arith.constant 0 : index
    %c0_2 = arith.constant 0 : index
    %1 = vector.load %arg2[%c0_1, %c0_2] : memref<32x256xbf16, #tpu.memory_space<vmem>>, vector<32x256xbf16>
    %cst = arith.constant dense<0.000000e+00> : vector<8x256xf32>
    %2 = tpu.matmul %0, %1, %cst {dimension_numbers = #tpu.dot_dimension_numbers<[1], [0], [0], [1], [0, 0, 1, 1], [], []>} : vector<8x32xbf16>, vector<32x256xbf16>, vector<8x256xf32> -> vector<8x256xf32>
    %3 = arith.truncf %2 : vector<8x256xf32> to vector<8x256xbf16>
    %c0_3 = arith.constant 0 : index
    %c0_4 = arith.constant 0 : index
    %4 = vector.load %arg3[%c0_3, %c0_4] : memref<1x256xbf16, #tpu.memory_space<vmem>>, vector<1x256xbf16>
    %5 = vector.broadcast %4 : vector<1x256xbf16> to vector<8x256xbf16>
    %6 = arith.addf %3, %5 : vector<8x256xbf16>
    %cst_5 = arith.constant 0.000000e+00 : bf16
    %7 = vector.broadcast %cst_5 : bf16 to vector<8x256xbf16>
    %8 = arith.maximumf %6, %7 : vector<8x256xbf16>
    %c0_6 = arith.constant 0 : index
    %c0_7 = arith.constant 0 : index
    %9 = vector.load %arg4[%c0_6, %c0_7] : memref<256x128xbf16, #tpu.memory_space<vmem>>, vector<256x128xbf16>
    %cst_8 = arith.constant dense<0.000000e+00> : vector<8x128xf32>
    %10 = tpu.matmul %8, %9, %cst_8 {dimension_numbers = #tpu.dot_dimension_numbers<[1], [0], [0], [1], [0, 0, 1, 1], [], []>} : vector<8x256xbf16>, vector<256x128xbf16>, vector<8x128xf32> -> vector<8x128xf32>
    %11 = arith.truncf %10 : vector<8x128xf32> to vector<8x128xbf16>
    %c0_9 = arith.constant 0 : index
    %c0_10 = arith.constant 0 : index
    %12 = vector.load %arg5[%c0_9, %c0_10] : memref<1x128xbf16, #tpu.memory_space<vmem>>, vector<1x128xbf16>
    %13 = vector.broadcast %12 : vector<1x128xbf16> to vector<8x128xbf16>
    %14 = arith.addf %11, %13 : vector<8x128xbf16>
    %cst_11 = arith.constant 0.000000e+00 : bf16
    %15 = vector.broadcast %cst_11 : bf16 to vector<8x128xbf16>
    %16 = arith.maximumf %14, %15 : vector<8x128xbf16>
    %c0_12 = arith.constant 0 : index
    %c0_13 = arith.constant 0 : index
    %17 = vector.load %arg6[%c0_12, %c0_13] : memref<128x64xbf16, #tpu.memory_space<vmem>>, vector<128x64xbf16>
    %cst_14 = arith.constant dense<0.000000e+00> : vector<8x64xf32>
    %18 = tpu.matmul %16, %17, %cst_14 {dimension_numbers = #tpu.dot_dimension_numbers<[1], [0], [0], [1], [0, 0, 1, 1], [], []>} : vector<8x128xbf16>, vector<128x64xbf16>, vector<8x64xf32> -> vector<8x64xf32>
    %19 = arith.truncf %18 : vector<8x64xf32> to vector<8x64xbf16>
    %c0_15 = arith.constant 0 : index
    %c0_16 = arith.constant 0 : index
    %20 = vector.load %arg7[%c0_15, %c0_16] : memref<1x64xbf16, #tpu.memory_space<vmem>>, vector<1x64xbf16>
    %21 = vector.broadcast %20 : vector<1x64xbf16> to vector<8x64xbf16>
    %22 = arith.addf %19, %21 : vector<8x64xbf16>
    %cst_17 = arith.constant 0.000000e+00 : bf16
    %23 = vector.broadcast %cst_17 : bf16 to vector<8x64xbf16>
    %24 = arith.maximumf %22, %23 : vector<8x64xbf16>
    %c0_18 = arith.constant 0 : index
    %c0_19 = arith.constant 0 : index
    %25 = vector.load %arg8[%c0_18, %c0_19] : memref<64x256xbf16, #tpu.memory_space<vmem>>, vector<64x256xbf16>
    %cst_20 = arith.constant dense<0.000000e+00> : vector<8x256xf32>
    %26 = tpu.matmul %24, %25, %cst_20 {dimension_numbers = #tpu.dot_dimension_numbers<[1], [0], [0], [1], [0, 0, 1, 1], [], []>} : vector<8x64xbf16>, vector<64x256xbf16>, vector<8x256xf32> -> vector<8x256xf32>
    %c0_21 = arith.constant 0 : index
    %c0_22 = arith.constant 0 : index
    %27 = vector.load %arg9[%c0_21, %c0_22] : memref<1x256xf32, #tpu.memory_space<vmem>>, vector<1x256xf32>
    %28 = vector.broadcast %27 : vector<1x256xf32> to vector<8x256xf32>
    %29 = arith.addf %26, %28 : vector<8x256xf32>
    %cst_23 = arith.constant 0.000000e+00 : f32
    %30 = vector.broadcast %cst_23 : f32 to vector<8x256xf32>
    %31 = arith.maximumf %29, %30 : vector<8x256xf32>
    %32 = math.absf %29 : vector<8x256xf32>
    %cst_24 = arith.constant 0.000000e+00 : f32
    %33 = vector.broadcast %cst_24 : f32 to vector<8x256xf32>
    %34 = arith.subf %33, %32 : vector<8x256xf32>
    %35 = math.exp %34 : vector<8x256xf32>
    %36 = math.log1p %35 : vector<8x256xf32>
    %37 = arith.addf %31, %36 : vector<8x256xf32>
    %38 = tpu.iota {dimensions = array<i32: 1>} : vector<8x256xi32>
    %c128_i32 = arith.constant 128 : i32
    %39 = vector.broadcast %c128_i32 : i32 to vector<8x256xi32>
    %40 = arith.cmpi slt, %38, %39 : vector<8x256xi32>
    %cst_25 = arith.constant 9.99999974E-5 : f32
    %41 = vector.broadcast %cst_25 : f32 to vector<8x256xf32>
    %42 = arith.addf %37, %41 : vector<8x256xf32>
    %43 = arith.select %40, %29, %42 : vector<8x256xi1>, vector<8x256xf32>
    %c0_26 = arith.constant 0 : index
    %c0_27 = arith.constant 0 : index
    %44 = vector.load %arg10[%c0_26, %c0_27] : memref<8x256xf32, #tpu.memory_space<vmem>>, vector<8x256xf32>
    tpu.vector_store %arg10[%c0_26, %c0_27], %43 {strides = array<i32>} : memref<8x256xf32, #tpu.memory_space<vmem>>, vector<8x256xf32>,
    return
  }
  func.func @transform_0(%arg0: i32) -> (i32, i32) {
    %c0_i32 = arith.constant 0 : i32
    %c0_i32_0 = arith.constant 0 : i32
    return %arg0, %c0_i32 : i32, i32
  }
  func.func @transform_1(%arg0: i32) -> (i32, i32) {
    %c0_i32 = arith.constant 0 : i32
    %c0_i32_0 = arith.constant 0 : i32
    %c0_i32_1 = arith.constant 0 : i32
    return %c0_i32, %c0_i32_0 : i32, i32
  }
  func.func @transform_2(%arg0: i32) -> (i32, i32) {
    %c0_i32 = arith.constant 0 : i32
    %c0_i32_0 = arith.constant 0 : i32
    %c0_i32_1 = arith.constant 0 : i32
    return %c0_i32, %c0_i32_0 : i32, i32
  }
  func.func @transform_3(%arg0: i32) -> (i32, i32) {
    %c0_i32 = arith.constant 0 : i32
    %c0_i32_0 = arith.constant 0 : i32
    %c0_i32_1 = arith.constant 0 : i32
    return %c0_i32, %c0_i32_0 : i32, i32
  }
  func.func @transform_4(%arg0: i32) -> (i32, i32) {
    %c0_i32 = arith.constant 0 : i32
    %c0_i32_0 = arith.constant 0 : i32
    %c0_i32_1 = arith.constant 0 : i32
    return %c0_i32, %c0_i32_0 : i32, i32
  }
  func.func @transform_5(%arg0: i32) -> (i32, i32) {
    %c0_i32 = arith.constant 0 : i32
    %c0_i32_0 = arith.constant 0 : i32
    %c0_i32_1 = arith.constant 0 : i32
    return %c0_i32, %c0_i32_0 : i32, i32
  }
  func.func @transform_6(%arg0: i32) -> (i32, i32) {
    %c0_i32 = arith.constant 0 : i32
    %c0_i32_0 = arith.constant 0 : i32
    %c0_i32_1 = arith.constant 0 : i32
    return %c0_i32, %c0_i32_0 : i32, i32
  }
  func.func @transform_7(%arg0: i32) -> (i32, i32) {
    %c0_i32 = arith.constant 0 : i32
    %c0_i32_0 = arith.constant 0 : i32
    %c0_i32_1 = arith.constant 0 : i32
    return %c0_i32, %c0_i32_0 : i32, i32
  }
  func.func @transform_8(%arg0: i32) -> (i32, i32) {
    %c0_i32 = arith.constant 0 : i32
    %c0_i32_0 = arith.constant 0 : i32
    %c0_i32_1 = arith.constant 0 : i32
    return %c0_i32, %c0_i32_0 : i32, i32
  }
  func.func @transform_9(%arg0: i32) -> (i32, i32) {
    %c0_i32 = arith.constant 0 : i32
    %c0_i32_0 = arith.constant 0 : i32
    return %arg0, %c0_i32 : i32, i32
  }
}

</mosaic_0001>

<llo_original>
// kernel: tpu_custom_call.1
$region0: #{tpu_custom_call.1}
  #allocation0 [shape = 'u32[]', space=smem, size = 0x4, offset = 0x4, fixed_abs, tag = 'smem constant byte address 0x4 - core index']
  #allocation1 [shape = 'u32[144,128]{1,0:T(1,128)}', space=vmem, size = 0x12000, scoped, tag = 'internal scratch']
  %s0 = inlined_call_operand.vmem [shape: bf16[8,32], index: 0, kind: input, shape index: {}]
  %s1 = inlined_call_operand.vmem [shape: bf16[32,256], index: 1, kind: input, shape index: {}]
  %s2 = inlined_call_operand.vmem [shape: bf16[1,256], index: 2, kind: input, shape index: {}]
  %s3 = inlined_call_operand.hbm [shape: bf16[256,128], index: 3, kind: input, shape index: {}]
  %s4 = inlined_call_operand.vmem [shape: bf16[1,128], index: 4, kind: input, shape index: {}]
  %s5 = inlined_call_operand.vmem [shape: bf16[128,64], index: 5, kind: input, shape index: {}]
  %s6 = inlined_call_operand.vmem [shape: bf16[1,64], index: 6, kind: input, shape index: {}]
  %s7 = inlined_call_operand.vmem [shape: bf16[64,256], index: 7, kind: input, shape index: {}]
  %s8 = inlined_call_operand.vmem [shape: f32[1,256], index: 8, kind: input, shape index: {}]
  %s9 = inlined_call_operand.hbm [shape: f32[8,256], index: 9, kind: output, shape index: {}]
  %s10 = sld [smem:[#allocation0]]
  $region50: #{tpu_custom_call.1} parent=0
    _
  %s12 = ssub.s32 1, %s10
  %s13 = scalar_select 0, %s12, %s10
  $region1: #{tpu_custom_call.1} parent=0
    #allocation2 [shape = 'u8[65536]{0}', space=vmem, size = 0x10000, scoped, tag = 'input window, operand 3, single buffered']
    #allocation3 [shape = 's32[1]{0}', space=sflag, size = 0x4, scoped, tag = 'scoped memory for tpu_custom_call.1']
    #allocation4 [shape = 's32[1]{0}', space=sflag, size = 0x4, scoped, tag = 'scoped memory for tpu_custom_call.1']
    #allocation5 [shape = 'u8[8192]{0}', space=vmem, size = 0x2000, scoped, tag = 'output window, operand 0, single buffered']
    %14 = vsyncpa [#allocation3], 0
    %15 = vsyncpa [#allocation4], 0
    // Predicated region
    $region2: #{tpu_custom_call.1} parent=1 // pred_check
      _
    $region3: #{tpu_custom_call.1} parent=1 // pred_check_branch
      %17 = sbr.rel (0) target = $region5
    $region4: #{tpu_custom_call.1} parent=1 // pred_region
      _
    $region5: #{tpu_custom_call.1} parent=1 // pred_fallthru
      _
    // Predicated region
    $region6: #{tpu_custom_call.1} parent=1 // pred_check
      _
    $region7: #{tpu_custom_call.1} parent=1 // pred_check_branch
      %19 = sbr.rel (0) target = $region9
    $region8: #{tpu_custom_call.1} parent=1 // pred_region
      _
    $region9: #{tpu_custom_call.1} parent=1 // pred_fallthru
      _
    // Predicated region
    $region10: #{tpu_custom_call.1} parent=1 // pred_check
      _
    $region11: #{tpu_custom_call.1} parent=1 // pred_check_branch
      %21 = sbr.rel (0) target = $region13
    $region12: #{tpu_custom_call.1} parent=1 // pred_region
      _
    $region13: #{tpu_custom_call.1} parent=1 // pred_fallthru
      _
    // Predicated region
    $region14: #{tpu_custom_call.1} parent=1 // pred_check
      _
    $region15: #{tpu_custom_call.1} parent=1 // pred_check_branch
      %23 = sbr.rel (0) target = $region17
    $region16: #{tpu_custom_call.1} parent=1 // pred_region
      %s25 = ssub.s32 2048, 2048
      %26 = vsyncadd [#allocation3], %s25
      %s27 = sshll.u32 [#allocation2], 4
      %s28 = int_to_ptr.vmem [resolvable:$true] %s27
      %33 = dma.hbm_to_vmem [thread:$0]  %s3, 2048, %s28, [#allocation3], 64, 64, 4
    $region17: #{tpu_custom_call.1} parent=1 // pred_fallthru
      _
    // Predicated region
    $region18: #{tpu_custom_call.1} parent=1 // pred_check
      _
    $region19: #{tpu_custom_call.1} parent=1 // pred_check_branch
      %35 = sbr.rel (0) target = $region21
    $region20: #{tpu_custom_call.1} parent=1 // pred_region
      _
    $region21: #{tpu_custom_call.1} parent=1 // pred_fallthru
      _
    // Predicated region
    $region22: #{tpu_custom_call.1} parent=1 // pred_check
      _
    $region23: #{tpu_custom_call.1} parent=1 // pred_check_branch
      %37 = sbr.rel (0) target = $region25
    $region24: #{tpu_custom_call.1} parent=1 // pred_region
      _
    $region25: #{tpu_custom_call.1} parent=1 // pred_fallthru
      _
    // Predicated region
    $region26: #{tpu_custom_call.1} parent=1 // pred_check
      _
    $region27: #{tpu_custom_call.1} parent=1 // pred_check_branch
      %39 = sbr.rel (0) target = $region29
    $region28: #{tpu_custom_call.1} parent=1 // pred_region
      _
    $region29: #{tpu_custom_call.1} parent=1 // pred_fallthru
      _
    // Predicated region
    $region30: #{tpu_custom_call.1} parent=1 // pred_check
      _
    $region31: #{tpu_custom_call.1} parent=1 // pred_check_branch
      %41 = sbr.rel (0) target = $region33
    $region32: #{tpu_custom_call.1} parent=1 // pred_region
      _
    $region33: #{tpu_custom_call.1} parent=1 // pred_fallthru
      _
    // Predicated region
    $region34: #{tpu_custom_call.1} parent=1 // pred_check
      _
    $region35: #{tpu_custom_call.1} parent=1 // pred_check_branch
      %43 = sbr.rel (0) target = $region37
    $region36: #{tpu_custom_call.1} parent=1 // pred_region
      _
    $region37: #{tpu_custom_call.1} parent=1 // pred_fallthru
      _
    // Predicated region
    $region38: #{tpu_custom_call.1} parent=1 // pred_check
      _
    $region39: #{tpu_custom_call.1} parent=1 // pred_check_branch
      %45 = sbr.rel (0) target = $region41
    $region40: #{tpu_custom_call.1} parent=1 // pred_region
      %46 = dma.done [#allocation3], 2048
    $region41: #{tpu_custom_call.1} parent=1 // pred_fallthru
      _
    %v48 = vld [vmem:[%s0] sm:$0xf]
    %v49 = vld [vmem:[%s1] sm:$0xff]
    %v50 = vld [vmem:[%s1 + $0x8] sm:$0xff]
    %v51 = vld [vmem:[%s1 + $0x10] sm:$0xff]
    %v52 = vld [vmem:[%s1 + $0x18] sm:$0xff]
    %v57 = vunpack.c.l.b16 %v49
    %v58 = vunpack.c.h.b16 %v49
    %v59 = vunpack.c.l.b16 %v50
    %v60 = vunpack.c.h.b16 %v50
    %v61 = vunpack.c.l.b16 %v51
    %v62 = vunpack.c.h.b16 %v51
    %v63 = vunpack.c.l.b16 %v52
    %v64 = vunpack.c.h.b16 %v52
    %v65 = vpack.c.b16 %v59, %v57
    %v66 = vpack.c.b16 %v60, %v58
    %v67 = vpack.c.b16 %v63, %v61
    %v68 = vpack.c.b16 %v64, %v62
    %vm73 = vcmask 261120
    %v75 = vsel %vm73, %v48, 0
    %77 = vmatprep.subr.bf16.mxu0 %v66
    %78 = vmatpush1.bf16.msra.mxu0 %v65
    %79 = vmatprep.subr.bf16.mxu0 %v68
    %80 = vmatpush1.bf16.msra.mxu0 %v67
    %81 = vmatprep.subr.bf16.mxu0 0
    %82 = vmatpush1.bf16.msra.mxu0 0
    %83 = vmatprep.subr.bf16.mxu0 0
    %84 = vmatpush1.bf16.msra.mxu0 0
    %85 = vmatprep.subr.bf16.mxu0 0
    %86 = vmatpush1.bf16.msra.mxu0 0
    %87 = vmatprep.subr.bf16.mxu0 0
    %88 = vmatpush1.bf16.msra.mxu0 0
    %89 = vmatprep.subr.bf16.mxu0 0
    %90 = vmatpush1.bf16.msra.mxu0 0
    %91 = vmatprep.subr.bf16.mxu0 0
    %92 = vmatpush1.bf16.msra.mxu0 0
    %93 = vmatprep.subr.bf16.mxu0 0
    %94 = vmatpush1.bf16.msra.mxu0 0
    %95 = vmatprep.subr.bf16.mxu0 0
    %96 = vmatpush1.bf16.msra.mxu0 0
    %97 = vmatprep.subr.bf16.mxu0 0
    %98 = vmatpush1.bf16.msra.mxu0 0
    %99 = vmatprep.subr.bf16.mxu0 0
    %100 = vmatpush1.bf16.msra.mxu0 0
    %101 = vmatprep.subr.bf16.mxu0 0
    %102 = vmatpush1.bf16.msra.mxu0 0
    %103 = vmatprep.subr.bf16.mxu0 0
    %104 = vmatpush1.bf16.msra.mxu0 0
    %105 = vmatprep.subr.bf16.mxu0 0
    %106 = vmatpush1.bf16.msra.mxu0 0
    %107 = vmatprep.subr.bf16.mxu0 0
    %108 = vmatpush1.bf16.msra.mxu0 0
    %109 = vmatprep.mubr.bf16.mxu0 0
    %110 = vmatmul.mubr.bf16.gmra.mrb[0].mxu0 %v75
    %v111 = vpop.f32.mrb[0].mxu0
    %v112 = vadd.f32 0.0, %v111
    %v113 = vpop.f32.mrb[0].mxu0
    %v114 = vadd.f32 0.0, %v113
    %v115 = vpop.f32.mrb[0].mxu0
    %v116 = vpop.f32.mrb[0].mxu0
    %117 = vdwg.mxu0
    %v118 = vpack.c.bf16 %v112, %v112
    %v119 = vpack.c.bf16 %v114, %v114
    %v120 = vld [vmem:[%s2] sm:$0x3]
    %v123 = vunpack.c.l.s4 1966171168
    %v124 = vunpack.c.0.s8 %v123
    %v125 = vlaneseq
    %v126 = vshrl.u32 %v125, 7
    %v127 = vsub.s32 %v124, %v126
    %v128 = vrot.slane %v120, %v127
    %v129 = vcombine.high %v128, %v128
    %v131 = vunpack.c.l.s4 1966171168
    %v132 = vunpack.c.0.s8 %v131
    %v133 = vlaneseq
    %v134 = vshrl.u32 %v133, 7
    %v135 = vsub.s32 %v132, %v134
    %v136 = vrot.slane %v128, %v135
    %v138 = vunpack.c.l.s4 1966171168
    %v139 = vunpack.c.0.s8 %v138
    %v140 = vlaneseq
    %v141 = vshrl.u32 %v140, 7
    %v142 = vsub.s32 %v139, %v141
    %v143 = vrot.slane %v129, %v142
    %v145 = vpack.i.b16 %v136, %v136
    %v147 = vlaneseq
    %v148 = vshrl.u32 %v147, 7
    %v149 = vsub.s32 0, %v148
    %v150 = vrot.slane %v145, %v149
    %v152 = vpack.i.b16 %v143, %v143
    %v154 = vlaneseq
    %v155 = vshrl.u32 %v154, 7
    %v156 = vsub.s32 0, %v155
    %v157 = vrot.slane %v152, %v156
    %v158 = vadd.bf16 %v118, %v150
    %v159 = vadd.bf16 %v119, %v157
    %v160 = vmax.bf16 %v158, 0
    %v161 = vmax.bf16 %v159, 0
    %v162 = vld [vmem:[#allocation2] sm:$0xf]
    %v163 = vld [vmem:[#allocation2 + $0x4] sm:$0xf]
    %v164 = vld [vmem:[#allocation2 + $0x8] sm:$0xf]
    %v165 = vld [vmem:[#allocation2 + $0xc] sm:$0xf]
    %v166 = vld [vmem:[#allocation2 + $0x10] sm:$0xf]
    %v167 = vld [vmem:[#allocation2 + $0x14] sm:$0xf]
    %v168 = vld [vmem:[#allocation2 + $0x18] sm:$0xf]
    %v169 = vld [vmem:[#allocation2 + $0x1c] sm:$0xf]
    %v170 = vld [vmem:[#allocation2 + $0x20] sm:$0xf]
    %v171 = vld [vmem:[#allocation2 + $0x24] sm:$0xf]
    %v172 = vld [vmem:[#allocation2 + $0x28] sm:$0xf]
    %v173 = vld [vmem:[#allocation2 + $0x2c] sm:$0xf]
    %v174 = vld [vmem:[#allocation2 + $0x30] sm:$0xf]
    %v175 = vld [vmem:[#allocation2 + $0x34] sm:$0xf]
    %v176 = vld [vmem:[#allocation2 + $0x38] sm:$0xf]
    %v177 = vld [vmem:[#allocation2 + $0x3c] sm:$0xf]
    %v178 = vld [vmem:[#allocation2 + $0x40] sm:$0xf]
    %v179 = vld [vmem:[#allocation2 + $0x44] sm:$0xf]
    %v180 = vld [vmem:[#allocation2 + $0x48] sm:$0xf]
    %v181 = vld [vmem:[#allocation2 + $0x4c] sm:$0xf]
    %v182 = vld [vmem:[#allocation2 + $0x50] sm:$0xf]
    %v183 = vld [vmem:[#allocation2 + $0x54] sm:$0xf]
    %v184 = vld [vmem:[#allocation2 + $0x58] sm:$0xf]
    %v185 = vld [vmem:[#allocation2 + $0x5c] sm:$0xf]
    %v186 = vld [vmem:[#allocation2 + $0x60] sm:$0xf]
    %v187 = vld [vmem:[#allocation2 + $0x64] sm:$0xf]
    %v188 = vld [vmem:[#allocation2 + $0x68] sm:$0xf]
    %v189 = vld [vmem:[#allocation2 + $0x6c] sm:$0xf]
    %v190 = vld [vmem:[#allocation2 + $0x70] sm:$0xf]
    %v191 = vld [vmem:[#allocation2 + $0x74] sm:$0xf]
    %v192 = vld [vmem:[#allocation2 + $0x78] sm:$0xf]
    %v193 = vld [vmem:[#allocation2 + $0x7c] sm:$0xf]
    %v226 = vunpack.c.l.b16 %v162
    %v227 = vunpack.c.l.b16 %v163
    %v228 = vunpack.c.l.b16 %v164
    %v229 = vunpack.c.l.b16 %v165
    %v230 = vunpack.c.l.b16 %v166
    %v231 = vunpack.c.l.b16 %v167
    %v232 = vunpack.c.l.b16 %v168
    %v233 = vunpack.c.l.b16 %v169
    %v234 = vunpack.c.l.b16 %v170
    %v235 = vunpack.c.l.b16 %v171
    %v236 = vunpack.c.l.b16 %v172
    %v237 = vunpack.c.l.b16 %v173
    %v238 = vunpack.c.l.b16 %v174
    %v239 = vunpack.c.l.b16 %v175
    %v240 = vunpack.c.l.b16 %v176
    %v241 = vunpack.c.l.b16 %v177
    %v242 = vunpack.c.l.b16 %v178
    %v243 = vunpack.c.l.b16 %v179
    %v244 = vunpack.c.l.b16 %v180
    %v245 = vunpack.c.l.b16 %v181
    %v246 = vunpack.c.l.b16 %v182
    %v247 = vunpack.c.l.b16 %v183
    %v248 = vunpack.c.l.b16 %v184
    %v249 = vunpack.c.l.b16 %v185
    %v250 = vunpack.c.l.b16 %v186
    %v251 = vunpack.c.l.b16 %v187
    %v252 = vunpack.c.l.b16 %v188
    %v253 = vunpack.c.l.b16 %v189
    %v254 = vunpack.c.l.b16 %v190
    %v255 = vunpack.c.l.b16 %v191
    %v256 = vunpack.c.l.b16 %v192
    %v257 = vunpack.c.l.b16 %v193
    %v258 = vpack.c.b16 %v227, %v226
    %v259 = vpack.c.b16 %v229, %v228
    %v260 = vpack.c.b16 %v231, %v230
    %v261 = vpack.c.b16 %v233, %v232
    %v262 = vpack.c.b16 %v235, %v234
    %v263 = vpack.c.b16 %v237, %v236
    %v264 = vpack.c.b16 %v239, %v238
    %v265 = vpack.c.b16 %v241, %v240
    %v266 = vpack.c.b16 %v243, %v242
    %v267 = vpack.c.b16 %v245, %v244
    %v268 = vpack.c.b16 %v247, %v246
    %v269 = vpack.c.b16 %v249, %v248
    %v270 = vpack.c.b16 %v251, %v250
    %v271 = vpack.c.b16 %v253, %v252
    %v272 = vpack.c.b16 %v255, %v254
    %v273 = vpack.c.b16 %v257, %v256
    %290 = vmatprep.subr.bf16.mxu0 0
    %291 = vmatpush1.bf16.msra.mxu0 %v258
    %292 = vmatprep.subr.bf16.mxu0 0
    %293 = vmatpush1.bf16.msra.mxu0 %v259
    %294 = vmatprep.subr.bf16.mxu0 0
    %295 = vmatpush1.bf16.msra.mxu0 %v260
    %296 = vmatprep.subr.bf16.mxu0 0
    %297 = vmatpush1.bf16.msra.mxu0 %v261
    %298 = vmatprep.subr.bf16.mxu0 0
    %299 = vmatpush1.bf16.msra.mxu0 %v262
    %300 = vmatprep.subr.bf16.mxu0 0
    %301 = vmatpush1.bf16.msra.mxu0 %v263
    %302 = vmatprep.subr.bf16.mxu0 0
    %303 = vmatpush1.bf16.msra.mxu0 %v264
    %304 = vmatprep.subr.bf16.mxu0 0
    %305 = vmatpush1.bf16.msra.mxu0 %v265
    %306 = vmatprep.subr.bf16.mxu0 0
    %307 = vmatpush1.bf16.msra.mxu0 %v266
    %308 = vmatprep.subr.bf16.mxu0 0
    %309 = vmatpush1.bf16.msra.mxu0 %v267
    %310 = vmatprep.subr.bf16.mxu0 0
    %311 = vmatpush1.bf16.msra.mxu0 %v268
    %312 = vmatprep.subr.bf16.mxu0 0
    %313 = vmatpush1.bf16.msra.mxu0 %v269
    %314 = vmatprep.subr.bf16.mxu0 0
    %315 = vmatpush1.bf16.msra.mxu0 %v270
    %316 = vmatprep.subr.bf16.mxu0 0
    %317 = vmatpush1.bf16.msra.mxu0 %v271
    %318 = vmatprep.subr.bf16.mxu0 0
    %319 = vmatpush1.bf16.msra.mxu0 %v272
    %320 = vmatprep.subr.bf16.mxu0 0
    %321 = vmatpush1.bf16.msra.mxu0 %v273
    %322 = vmatprep.mubr.bf16.mxu0 %v161
    %323 = vmatmul.mubr.bf16.gmra.mrb[0].mxu0 %v160
    %v324 = vpop.f32.mrb[0].mxu0
    %v325 = vadd.f32 0.0, %v324
    %v326 = vpop.f32.mrb[0].mxu0
    %v327 = vpop.f32.mrb[0].mxu0
    %v328 = vpop.f32.mrb[0].mxu0
    %329 = vdwg.mxu0
    %v330 = vpack.c.bf16 %v325, %v325
    %v331 = vld [vmem:[%s4] sm:$0x1]
    %v333 = vpack.i.b16 %v331, %v331
    %v335 = vlaneseq
    %v336 = vshrl.u32 %v335, 7
    %v337 = vsub.s32 0, %v336
    %v338 = vrot.slane %v333, %v337
    %v339 = vadd.bf16 %v330, %v338
    %v340 = vmax.bf16 %v339, 0
    %v341 = vld [vmem:[%s5] sm:$0xf]
    %v342 = vld [vmem:[%s5 + $0x4] sm:$0xf]
    %v343 = vld [vmem:[%s5 + $0x8] sm:$0xf]
    %v344 = vld [vmem:[%s5 + $0xc] sm:$0xf]
    %v345 = vld [vmem:[%s5 + $0x10] sm:$0xf]
    %v346 = vld [vmem:[%s5 + $0x14] sm:$0xf]
    %v347 = vld [vmem:[%s5 + $0x18] sm:$0xf]
    %v348 = vld [vmem:[%s5 + $0x1c] sm:$0xf]
    %v349 = vld [vmem:[%s5 + $0x20] sm:$0xf]
    %v350 = vld [vmem:[%s5 + $0x24] sm:$0xf]
    %v351 = vld [vmem:[%s5 + $0x28] sm:$0xf]
    %v352 = vld [vmem:[%s5 + $0x2c] sm:$0xf]
    %v353 = vld [vmem:[%s5 + $0x30] sm:$0xf]
    %v354 = vld [vmem:[%s5 + $0x34] sm:$0xf]
    %v355 = vld [vmem:[%s5 + $0x38] sm:$0xf]
    %v356 = vld [vmem:[%s5 + $0x3c] sm:$0xf]
    %v373 = vunpack.c.l.b16 %v341
    %v374 = vunpack.c.l.b16 %v342
    %v375 = vunpack.c.l.b16 %v343
    %v376 = vunpack.c.l.b16 %v344
    %v377 = vunpack.c.l.b16 %v345
    %v378 = vunpack.c.l.b16 %v346
    %v379 = vunpack.c.l.b16 %v347
    %v380 = vunpack.c.l.b16 %v348
    %v381 = vunpack.c.l.b16 %v349
    %v382 = vunpack.c.l.b16 %v350
    %v383 = vunpack.c.l.b16 %v351
    %v384 = vunpack.c.l.b16 %v352
    %v385 = vunpack.c.l.b16 %v353
    %v386 = vunpack.c.l.b16 %v354
    %v387 = vunpack.c.l.b16 %v355
    %v388 = vunpack.c.l.b16 %v356
    %v389 = vpack.c.b16 %v374, %v373
    %v390 = vpack.c.b16 %v376, %v375
    %v391 = vpack.c.b16 %v378, %v377
    %v392 = vpack.c.b16 %v380, %v379
    %v393 = vpack.c.b16 %v382, %v381
    %v394 = vpack.c.b16 %v384, %v383
    %v395 = vpack.c.b16 %v386, %v385
    %v396 = vpack.c.b16 %v388, %v387
    %405 = vmatprep.subr.bf16.mxu0 0
    %406 = vmatpush1.bf16.msra.mxu0 %v389
    %407 = vmatprep.subr.bf16.mxu0 0
    %408 = vmatpush1.bf16.msra.mxu0 %v390
    %409 = vmatprep.subr.bf16.mxu0 0
    %410 = vmatpush1.bf16.msra.mxu0 %v391
    %411 = vmatprep.subr.bf16.mxu0 0
    %412 = vmatpush1.bf16.msra.mxu0 %v392
    %413 = vmatprep.subr.bf16.mxu0 0
    %414 = vmatpush1.bf16.msra.mxu0 %v393
    %415 = vmatprep.subr.bf16.mxu0 0
    %416 = vmatpush1.bf16.msra.mxu0 %v394
    %417 = vmatprep.subr.bf16.mxu0 0
    %418 = vmatpush1.bf16.msra.mxu0 %v395
    %419 = vmatprep.subr.bf16.mxu0 0
    %420 = vmatpush1.bf16.msra.mxu0 %v396
    %421 = vmatprep.subr.bf16.mxu0 0
    %422 = vmatpush1.bf16.msra.mxu0 0
    %423 = vmatprep.subr.bf16.mxu0 0
    %424 = vmatpush1.bf16.msra.mxu0 0
    %425 = vmatprep.subr.bf16.mxu0 0
    %426 = vmatpush1.bf16.msra.mxu0 0
    %427 = vmatprep.subr.bf16.mxu0 0
    %428 = vmatpush1.bf16.msra.mxu0 0
    %429 = vmatprep.subr.bf16.mxu0 0
    %430 = vmatpush1.bf16.msra.mxu0 0
    %431 = vmatprep.subr.bf16.mxu0 0
    %432 = vmatpush1.bf16.msra.mxu0 0
    %433 = vmatprep.subr.bf16.mxu0 0
    %434 = vmatpush1.bf16.msra.mxu0 0
    %435 = vmatprep.subr.bf16.mxu0 0
    %436 = vmatpush1.bf16.msra.mxu0 0
    %437 = vmatprep.mubr.bf16.mxu0 0
    %438 = vmatmul.mubr.bf16.gmra.mrb[0].mxu0 %v340
    %v439 = vpop.f32.mrb[0].mxu0
    %v440 = vadd.f32 0.0, %v439
    %v441 = vpop.f32.mrb[0].mxu0
    %v442 = vpop.f32.mrb[0].mxu0
    %v443 = vpop.f32.mrb[0].mxu0
    %444 = vdwg.mxu0
    %v445 = vpack.c.bf16 %v440, %v440
    %v446 = vld [vmem:[%s6] sm:$0x1]
    %v448 = vpack.i.b16 %v446, %v446
    %v450 = vlaneseq
    %v451 = vshrl.u32 %v450, 7
    %v452 = vsub.s32 0, %v451
    %v453 = vrot.slane %v448, %v452
    %v454 = vadd.bf16 %v445, %v453
    %v455 = vmax.bf16 %v454, 0
    %v456 = vld [vmem:[%s7] sm:$0xff]
    %v457 = vld [vmem:[%s7 + $0x8] sm:$0xff]
    %v458 = vld [vmem:[%s7 + $0x10] sm:$0xff]
    %v459 = vld [vmem:[%s7 + $0x18] sm:$0xff]
    %v460 = vld [vmem:[%s7 + $0x20] sm:$0xff]
    %v461 = vld [vmem:[%s7 + $0x28] sm:$0xff]
    %v462 = vld [vmem:[%s7 + $0x30] sm:$0xff]
    %v463 = vld [vmem:[%s7 + $0x38] sm:$0xff]
    %v464 = vld [vmem:[%s8] sm:$0x3]
    %v466 = vlaneseq
    %v467 = vshrl.u32 %v466, 7
    %v468 = vsub.s32 0, %v467
    %v469 = vrot.slane %v464, %v468
    %v470 = vlaneseq
    %v471 = vshrl.u32 %v470, 7
    %v472 = vsub.s32 1, %v471
    %v473 = vrot.slane %v464, %v472
    %v484 = vunpack.c.l.b16 %v456
    %v485 = vunpack.c.h.b16 %v456
    %v486 = vunpack.c.l.b16 %v457
    %v487 = vunpack.c.h.b16 %v457
    %v488 = vunpack.c.l.b16 %v458
    %v489 = vunpack.c.h.b16 %v458
    %v490 = vunpack.c.l.b16 %v459
    %v491 = vunpack.c.h.b16 %v459
    %v492 = vunpack.c.l.b16 %v460
    %v493 = vunpack.c.h.b16 %v460
    %v494 = vunpack.c.l.b16 %v461
    %v495 = vunpack.c.h.b16 %v461
    %v496 = vunpack.c.l.b16 %v462
    %v497 = vunpack.c.h.b16 %v462
    %v498 = vunpack.c.l.b16 %v463
    %v499 = vunpack.c.h.b16 %v463
    %v500 = vpack.c.b16 %v486, %v484
    %v501 = vpack.c.b16 %v487, %v485
    %v502 = vpack.c.b16 %v490, %v488
    %v503 = vpack.c.b16 %v491, %v489
    %v504 = vpack.c.b16 %v494, %v492
    %v505 = vpack.c.b16 %v495, %v493
    %v506 = vpack.c.b16 %v498, %v496
    %v507 = vpack.c.b16 %v499, %v497
    %vm516 = vcmask 523264
    %v518 = vsel %vm516, %v455, 0
    %520 = vmatprep.subr.bf16.mxu0 %v501
    %521 = vmatpush1.bf16.msra.mxu0 %v500
    %522 = vmatprep.subr.bf16.mxu0 %v503
    %523 = vmatpush1.bf16.msra.mxu0 %v502
    %524 = vmatprep.subr.bf16.mxu0 %v505
    %525 = vmatpush1.bf16.msra.mxu0 %v504
    %526 = vmatprep.subr.bf16.mxu0 %v507
    %527 = vmatpush1.bf16.msra.mxu0 %v506
    %528 = vmatprep.subr.bf16.mxu0 0
    %529 = vmatpush1.bf16.msra.mxu0 0
    %530 = vmatprep.subr.bf16.mxu0 0
    %531 = vmatpush1.bf16.msra.mxu0 0
    %532 = vmatprep.subr.bf16.mxu0 0
    %533 = vmatpush1.bf16.msra.mxu0 0
    %534 = vmatprep.subr.bf16.mxu0 0
    %535 = vmatpush1.bf16.msra.mxu0 0
    %536 = vmatprep.subr.bf16.mxu0 0
    %537 = vmatpush1.bf16.msra.mxu0 0
    %538 = vmatprep.subr.bf16.mxu0 0
    %539 = vmatpush1.bf16.msra.mxu0 0
    %540 = vmatprep.subr.bf16.mxu0 0
    %541 = vmatpush1.bf16.msra.mxu0 0
    %542 = vmatprep.subr.bf16.mxu0 0
    %543 = vmatpush1.bf16.msra.mxu0 0
    %544 = vmatprep.subr.bf16.mxu0 0
    %545 = vmatpush1.bf16.msra.mxu0 0
    %546 = vmatprep.subr.bf16.mxu0 0
    %547 = vmatpush1.bf16.msra.mxu0 0
    %548 = vmatprep.subr.bf16.mxu0 0
    %549 = vmatpush1.bf16.msra.mxu0 0
    %550 = vmatprep.subr.bf16.mxu0 0
    %551 = vmatpush1.bf16.msra.mxu0 0
    %552 = vmatprep.mubr.bf16.mxu0 0
    %553 = vmatmul.mubr.bf16.gmra.mrb[0].mxu0 %v518
    %v554 = vpop.f32.mrb[0].mxu0
    %v555 = vadd.f32 %v469, %v554
    %v556 = vpop.f32.mrb[0].mxu0
    %v557 = vadd.f32 %v473, %v556
    %v558 = vpop.f32.mrb[0].mxu0
    %v559 = vpop.f32.mrb[0].mxu0
    %560 = vdwg.mxu0
    %v561 = vmax.f32 %v555, 0.0
    %v562 = vmax.f32 %v557, 0.0
    %v563 = vand.u32 2147483647, %v555
    %v564 = vand.u32 2147483647, %v557
    %v565 = vsub.f32 0.0, %v563
    %v566 = vsub.f32 0.0, %v564
    %v567 = vmul.f32 %v565, 1.442695
    %v568 = vpow.pop %v567
    %v569 = vmul.f32 %v566, 1.442695
    %v570 = vpow.pop %v569
    %v571 = vadd.f32 %v568, 1.0
    %v572 = vlog2.pop %v571
    %v573 = vmul.f32 %v572, 0.6931472
    %v574 = vmul.f32 -0.5, %v568
    %v575 = vadd.f32 %v574, 1.0
    %v576 = vmul.f32 %v575, %v568
    %v577 = vand.u32 2147483647, %v568
    %vm578 = vcmp.lt.f32.partialorder %v577, 0.0004427343
    %v579 = vsel %vm578, %v576, %v573
    %v580 = vadd.f32 %v570, 1.0
    %v581 = vlog2.pop %v580
    %v582 = vmul.f32 %v581, 0.6931472
    %v583 = vmul.f32 -0.5, %v570
    %v584 = vadd.f32 %v583, 1.0
    %v585 = vmul.f32 %v584, %v570
    %v586 = vand.u32 2147483647, %v570
    %vm587 = vcmp.lt.f32.partialorder %v586, 0.0004427343
    %v588 = vsel %vm587, %v585, %v582
    %v589 = vadd.f32 %v561, %v579
    %v590 = vadd.f32 %v562, %v588
    %v591 = vlaneseq
    %v592 = vand.u32 %v591, 127
    %v593 = vadd.s32 %v592, 128
    %vm594 = vcmp.lt.s32.totalorder %v592, 128
    %vm595 = vcmp.lt.s32.totalorder %v593, 128
    %v596 = vadd.f32 %v589, 0.0001
    %v597 = vadd.f32 %v590, 0.0001
    %v598 = vsel %vm594, %v555, %v596
    %v599 = vsel %vm595, %v557, %v597
    %600 = vst [vmem:[#allocation5] sm:$0xff] %v598
    %601 = vst [vmem:[#allocation5 + $0x8] sm:$0xff] %v599
    // Predicated region
    $region42: #{tpu_custom_call.1} parent=1 // pred_check
      _
    $region43: #{tpu_custom_call.1} parent=1 // pred_check_branch
      %603 = sbr.rel (0) target = $region45
    $region44: #{tpu_custom_call.1} parent=1 // pred_region
      %s605 = ssub.s32 256, 256
      %606 = vsyncadd [#allocation4], %s605
      %s608 = sshll.u32 [#allocation5], 4
      %s609 = int_to_ptr.vmem [resolvable:$true] %s608
      %611 = dma.vmem_to_hbm [thread:$0]  %s609, 256, %s9, [#allocation4]
    $region45: #{tpu_custom_call.1} parent=1 // pred_fallthru
      _
    // Predicated region
    $region46: #{tpu_custom_call.1} parent=1 // pred_check
      _
    $region47: #{tpu_custom_call.1} parent=1 // pred_check_branch
      %613 = sbr.rel (0) target = $region49
    $region48: #{tpu_custom_call.1} parent=1 // pred_region
      %614 = dma.done [#allocation4], 256
    $region49: #{tpu_custom_call.1} parent=1 // pred_fallthru
      _
    %615 = vsyncpa [#allocation3], 1
    %616 = vsyncpa [#allocation4], 1

</llo_original>
